<compile_context>
chip_gen: v7x
topology: tpu7x:2x2x1
jax: 0.10.0
libtpu: 0.0.40
codegen_flags: <defaults>
</compile_context>

<pallas_src>
from typing import NamedTuple, Optional, Sequence

import numpy as np
import jax
import jax.numpy as jnp
from jax.experimental import pallas as pl
from jax.experimental.pallas import tpu as pltpu


class WsodBatch(NamedTuple):
    images: jnp.ndarray                          # (N, C, H, W) float32
    image_sizes: jnp.ndarray                     # (N, 2) int32
    proposals: Sequence[Optional[jnp.ndarray]]   # list of (P, 4) float32 or None


# ---------------------------------------------------------------------------
# Glue: bilinear interpolation matrices (static shapes -> plain numpy).
# Matches torch.nn.functional.interpolate(mode="bilinear", align_corners=False), no antialias.
# ---------------------------------------------------------------------------
def _bilinear_matrix(in_size: int, out_size: int) -> np.ndarray:
    dst = np.arange(out_size, dtype=np.float32)
    scale = np.float32(in_size) / np.float32(out_size)
    src = (dst + np.float32(0.5)) * scale - np.float32(0.5)
    src = np.maximum(src, np.float32(0.0))           # PyTorch clamps only the low end
    i0 = np.floor(src).astype(np.int32)
    frac = (src - i0.astype(np.float32)).astype(np.float32)
    i1 = np.minimum(i0 + 1, in_size - 1)
    rows = np.arange(out_size)
    m = np.zeros((out_size, in_size), np.float32)
    m[rows, i0] += (1.0 - frac)
    m[rows, i1] += frac                               # rows distinct -> no duplicate-index issue
    return m                                          # (out_size, in_size)


# ---------------------------------------------------------------------------
# Pallas kernels
# ---------------------------------------------------------------------------
_ROW_TILE = 256            # width-pass output-row tile (2nd-to-last dim, multiple of 8)
_COL_TILE = 256            # height-pass column tile (last dim, multiple of 128)
# Tiling bounds the per-step footprint to ~26 MiB at detection scale (2000x1333), so a single
# 48 MiB scoped-VMEM budget is safe on every generation (v7x physical VMEM = 64 MiB) while still
# leaving >= 2x headroom for double buffering + compiler scratch.
_VMEM_LIMIT_BYTES = 48 * 1024 * 1024


def _resize_width_kernel(img_ref, wxt_ref, out_ref):
    # img_ref: (1, C, tile_r, W)   input dtype (f32 or bf16; cast to bf16 here, on the VPU)
    # wxt_ref: (W, out_w)          bf16
    # out_ref: (1, C, tile_r, out_w)
    n_chan = out_ref.shape[1]
    wxt = wxt_ref[...]
    for c in range(n_chan):
        x = img_ref[0, c].astype(jnp.bfloat16)
        out_ref[0, c] = jnp.dot(
            x, wxt, preferred_element_type=jnp.float32
        ).astype(out_ref.dtype)


def _resize_height_kernel(img_ref, wy_ref, out_ref):
    # img_ref: (1, C, H, tile_c)   input dtype (cast to bf16 here)
    # wy_ref : (out_h, H)          bf16
    # out_ref: (1, C, out_h, tile_c)
    n_chan = out_ref.shape[1]
    wy = wy_ref[...]
    for c in range(n_chan):
        x = img_ref[0, c].astype(jnp.bfloat16)
        out_ref[0, c] = jnp.dot(
            wy, x, preferred_element_type=jnp.float32
        ).astype(out_ref.dtype)


def _resize_last_dim(x: jnp.ndarray, out_w: int, out_dtype) -> jnp.ndarray:
    """Resize the last (width) dimension: (N,C,H,W) -> (N,C,H,out_w). Tiled over (image, row-tile)."""
    N, C, H, W = x.shape
    wxt = jnp.asarray(_bilinear_matrix(W, out_w).T, dtype=jnp.bfloat16)   # (W, out_w)
    tile_r = H if H <= _ROW_TILE else _ROW_TILE                           # full dim or multiple of 8
    return pl.pallas_call(
        _resize_width_kernel,
        out_shape=jax.ShapeDtypeStruct((N, C, H, out_w), out_dtype),
        grid_spec=pltpu.PrefetchScalarGridSpec(
            num_scalar_prefetch=0,
            grid=(N, pl.cdiv(H, tile_r)),
            in_specs=[
                pl.BlockSpec((1, C, tile_r, W), lambda n, r: (n, 0, r, 0)),
                pl.BlockSpec((W, out_w), lambda n, r: (0, 0)),            # weights resident
            ],
            out_specs=pl.BlockSpec((1, C, tile_r, out_w), lambda n, r: (n, 0, r, 0)),
        ),
        compiler_params=pltpu.CompilerParams(
            dimension_semantics=("parallel", "parallel"),
            vmem_limit_bytes=_VMEM_LIMIT_BYTES,
        ),
    )(x, wxt)


def _resize_second_dim(x: jnp.ndarray, out_h: int, out_dtype) -> jnp.ndarray:
    """Resize the height dimension: (N,C,H,W) -> (N,C,out_h,W). Tiled over (image, col-tile)."""
    N, C, H, W = x.shape
    wy = jnp.asarray(_bilinear_matrix(H, out_h), dtype=jnp.bfloat16)      # (out_h, H)
    tile_c = W if W <= _COL_TILE else _COL_TILE                           # full dim or multiple of 128
    return pl.pallas_call(
        _resize_height_kernel,
        out_shape=jax.ShapeDtypeStruct((N, C, out_h, W), out_dtype),
        grid_spec=pltpu.PrefetchScalarGridSpec(
            num_scalar_prefetch=0,
            grid=(N, pl.cdiv(W, tile_c)),
            in_specs=[
                pl.BlockSpec((1, C, H, tile_c), lambda n, c: (n, 0, 0, c)),
                pl.BlockSpec((out_h, H), lambda n, c: (0, 0)),            # weights resident
            ],
            out_specs=pl.BlockSpec((1, C, out_h, tile_c), lambda n, c: (n, 0, 0, c)),
        ),
        compiler_params=pltpu.CompilerParams(
            dimension_semantics=("parallel", "parallel"),
            vmem_limit_bytes=_VMEM_LIMIT_BYTES,
        ),
    )(x, wy)


def _bilinear_resize_pallas(images: jnp.ndarray, out_h: int, out_w: int) -> jnp.ndarray:
    """(N,C,H,W) -> (N,C,out_h,out_w); pass order chosen to do the more-shrinking pass first."""
    N, C, H, W = images.shape
    out_dtype = images.dtype

    # Static cost model: flops ~ intermediate size * (sum of contraction dims).
    cost_width_first = out_w * H * (W + out_h)
    cost_height_first = out_h * W * (H + out_w)

    if cost_width_first <= cost_height_first:
        tmp = _resize_last_dim(images, out_w, jnp.bfloat16)        # (N, C, H, out_w) bf16
        return _resize_second_dim(tmp, out_h, out_dtype)           # (N, C, out_h, out_w)
    else:
        tmp = _resize_second_dim(images, out_h, jnp.bfloat16)      # (N, C, out_h, W) bf16
        return _resize_last_dim(tmp, out_w, out_dtype)             # (N, C, out_h, out_w)


# ---------------------------------------------------------------------------
# Module equivalents
# ---------------------------------------------------------------------------
class BatchResizeSmallestEdge:
    def __init__(self, size: int = 480, max_size: int = 2000):
        self.size = size
        self.max_size = max_size

    def __call__(self, batch: WsodBatch) -> WsodBatch:
        N, C, H, W = batch.images.shape
        min_ratio = self.size / min(H, W)
        max_ratio = self.max_size / max(H, W)
        ratio = min(min_ratio, max_ratio)

        # Quirk kept from the reference module: new_size = round(shape[[-1,-2]] * ratio)
        # => resize target (height, width) = (round(W*ratio), round(H*ratio)).
        out_h = int(round(W * ratio))
        out_w = int(round(H * ratio))

        # NOTE: resize matmuls run in bf16 with f32 accumulation (~1e-2 rel. error vs f32 ref).
        images = _bilinear_resize_pallas(batch.images, out_h, out_w)

        # tiny int scaling (2 values per image) kept as plain-JAX glue (jnp.round = half-to-even)
        image_sizes = jnp.round(
            batch.image_sizes.astype(jnp.float32) * jnp.float32(ratio)
        ).astype(batch.image_sizes.dtype)

        # proposals: plain JAX scalar multiply (a Pallas call per (P,4) array would be pure
        # launch overhead + masked 4-lane stores).
        proposals = [
            None if p is None else p * jnp.asarray(ratio, dtype=p.dtype)
            for p in batch.proposals
        ]

        return WsodBatch(images=images, image_sizes=image_sizes, proposals=proposals)


class BatchRandomResizeSmallestEdge(BatchResizeSmallestEdge):
    def __init__(self, sizes: Sequence[int] = (480, 576, 688, 864, 1200)):
        super().__init__()
        self.sizes = list(sizes)

    def __call__(self, batch: WsodBatch) -> WsodBatch:
        # host-side random size choice, exactly as the reference (numpy global RNG)
        self.size = int(np.random.choice(self.sizes))
        return super().__call__(batch)


# ---------------------------------------------------------------------------
# Demo
# ---------------------------------------------------------------------------
if __name__ == "__main__":
    np.random.seed(0)                     # deterministic size choice
    key = jax.random.PRNGKey(0)
    k1, k2 = jax.random.split(key)

    N, C, H, W = 2, 4, 16, 12
    images = jax.random.uniform(k1, (N, C, H, W), dtype=jnp.float32)
    image_sizes = jnp.array([[H, W], [H, W]], dtype=jnp.int32)
    proposals = [
        jax.random.uniform(k2, (8, 4), dtype=jnp.float32) * jnp.array([W, H, W, H], jnp.float32),
        None,                             # exercise the "if proposals[i] is not None" branch
    ]
    batch = WsodBatch(images=images, image_sizes=image_sizes, proposals=proposals)

    module = BatchRandomResizeSmallestEdge(sizes=[24, 32, 40])   # small sizes for the demo
    out = module(batch)

    jax.block_until_ready(out.images)
    jax.block_until_ready(out.image_sizes)
    jax.block_until_ready(out.proposals[0])

    # shape sanity against the module's own formula
    size = module.size
    ratio = min(size / min(H, W), module.max_size / max(H, W))
    exp_h = int(round(W * ratio))
    exp_w = int(round(H * ratio))
    assert out.images.shape == (N, C, exp_h, exp_w), out.images.shape
    assert out.image_sizes.shape == (N, 2)
    assert out.proposals[0].shape == (8, 4) and out.proposals[1] is None
    assert bool(jnp.all(jnp.isfinite(out.images)))

    # numeric sanity: a constant image must resize to (approximately) the same constant
    const_img = jnp.ones((N, C, H, W), jnp.float32)
    const_out = _bilinear_resize_pallas(const_img, exp_h, exp_w)
    jax.block_until_ready(const_out)
    assert const_out.shape == (N, C, exp_h, exp_w)
    assert bool(jnp.all(jnp.abs(const_out - 1.0) < 0.05)), "constant-image resize check failed"

    print("KERNEL_OK")
</pallas_src>

<mosaic_0001>
module attributes {stable_mosaic.version = 11 : i64} {
  func.func @_resize_height_kernel(%arg0: i32, %arg1: i32, %arg2: memref<1x4x16x12xf32, #tpu.memory_space<vmem>>, %arg3: memref<24x16xbf16, #tpu.memory_space<vmem>>, %arg4: memref<1x4x24x12xbf16, #tpu.memory_space<vmem>>) attributes {dimension_semantics = [#tpu.dimension_semantics<parallel>, #tpu.dimension_semantics<parallel>], iteration_bounds = array<i64: 2, 1>, scalar_prefetch = 0 : i64, scratch_operands = 0 : i64, tpu.core_type = #tpu.core_type<tc>, window_params = [{transform_indices = @transform_0, window_bounds = array<i64: 1, 4, 16, 12>}, {pipeline_mode = #tpu.pipeline_mode<synchronous>, transform_indices = @transform_1, window_bounds = array<i64: 24, 16>}, {transform_indices = @transform_2, window_bounds = array<i64: 1, 4, 24, 12>}]} {
    %c0 = arith.constant 0 : index
    %c0_0 = arith.constant 0 : index
    %0 = vector.load %arg3[%c0, %c0_0] : memref<24x16xbf16, #tpu.memory_space<vmem>>, vector<24x16xbf16>
    %c0_1 = arith.constant 0 : index
    %c0_2 = arith.constant 0 : index
    %c0_3 = arith.constant 0 : index
    %c0_4 = arith.constant 0 : index
    %1 = vector.load %arg2[%c0_1, %c0_2, %c0_3, %c0_4] : memref<1x4x16x12xf32, #tpu.memory_space<vmem>>, vector<1x1x16x12xf32>
    %2 = vector.shape_cast %1 : vector<1x1x16x12xf32> to vector<16x12xf32>
    %3 = arith.truncf %2 : vector<16x12xf32> to vector<16x12xbf16>
    %cst = arith.constant dense<0.000000e+00> : vector<24x12xf32>
    %4 = tpu.matmul %0, %3, %cst {dimension_numbers = #tpu.dot_dimension_numbers<[1], [0], [0], [1], [0, 0, 1, 1], [], []>} : vector<24x16xbf16>, vector<16x12xbf16>, vector<24x12xf32> -> vector<24x12xf32>
    %5 = arith.truncf %4 : vector<24x12xf32> to vector<24x12xbf16>
    %c0_5 = arith.constant 0 : index
    %c0_6 = arith.constant 0 : index
    %c0_7 = arith.constant 0 : index
    %c0_8 = arith.constant 0 : index
    %6 = vector.load %arg4[%c0_5, %c0_6, %c0_7, %c0_8] : memref<1x4x24x12xbf16, #tpu.memory_space<vmem>>, vector<1x1x24x12xbf16>
    %7 = vector.shape_cast %6 : vector<1x1x24x12xbf16> to vector<24x12xbf16>
    %8 = vector.shape_cast %5 : vector<24x12xbf16> to vector<1x1x24x12xbf16>
    tpu.vector_store %arg4[%c0_5, %c0_6, %c0_7, %c0_8], %8 {strides = array<i32>} : memref<1x4x24x12xbf16, #tpu.memory_space<vmem>>, vector<1x1x24x12xbf16>,
    %c0_9 = arith.constant 0 : index
    %c1 = arith.constant 1 : index
    %c0_10 = arith.constant 0 : index
    %c0_11 = arith.constant 0 : index
    %9 = vector.load %arg2[%c0_9, %c1, %c0_10, %c0_11] : memref<1x4x16x12xf32, #tpu.memory_space<vmem>>, vector<1x1x16x12xf32>
    %10 = vector.shape_cast %9 : vector<1x1x16x12xf32> to vector<16x12xf32>
    %11 = arith.truncf %10 : vector<16x12xf32> to vector<16x12xbf16>
    %cst_12 = arith.constant dense<0.000000e+00> : vector<24x12xf32>
    %12 = tpu.matmul %0, %11, %cst_12 {dimension_numbers = #tpu.dot_dimension_numbers<[1], [0], [0], [1], [0, 0, 1, 1], [], []>} : vector<24x16xbf16>, vector<16x12xbf16>, vector<24x12xf32> -> vector<24x12xf32>
    %13 = arith.truncf %12 : vector<24x12xf32> to vector<24x12xbf16>
    %c0_13 = arith.constant 0 : index
    %c1_14 = arith.constant 1 : index
    %c0_15 = arith.constant 0 : index
    %c0_16 = arith.constant 0 : index
    %14 = vector.load %arg4[%c0_13, %c1_14, %c0_15, %c0_16] : memref<1x4x24x12xbf16, #tpu.memory_space<vmem>>, vector<1x1x24x12xbf16>
    %15 = vector.shape_cast %14 : vector<1x1x24x12xbf16> to vector<24x12xbf16>
    %16 = vector.shape_cast %13 : vector<24x12xbf16> to vector<1x1x24x12xbf16>
    tpu.vector_store %arg4[%c0_13, %c1_14, %c0_15, %c0_16], %16 {strides = array<i32>} : memref<1x4x24x12xbf16, #tpu.memory_space<vmem>>, vector<1x1x24x12xbf16>,
    %c0_17 = arith.constant 0 : index
    %c2 = arith.constant 2 : index
    %c0_18 = arith.constant 0 : index
    %c0_19 = arith.constant 0 : index
    %17 = vector.load %arg2[%c0_17, %c2, %c0_18, %c0_19] : memref<1x4x16x12xf32, #tpu.memory_space<vmem>>, vector<1x1x16x12xf32>
    %18 = vector.shape_cast %17 : vector<1x1x16x12xf32> to vector<16x12xf32>
    %19 = arith.truncf %18 : vector<16x12xf32> to vector<16x12xbf16>
    %cst_20 = arith.constant dense<0.000000e+00> : vector<24x12xf32>
    %20 = tpu.matmul %0, %19, %cst_20 {dimension_numbers = #tpu.dot_dimension_numbers<[1], [0], [0], [1], [0, 0, 1, 1], [], []>} : vector<24x16xbf16>, vector<16x12xbf16>, vector<24x12xf32> -> vector<24x12xf32>
    %21 = arith.truncf %20 : vector<24x12xf32> to vector<24x12xbf16>
    %c0_21 = arith.constant 0 : index
    %c2_22 = arith.constant 2 : index
    %c0_23 = arith.constant 0 : index
    %c0_24 = arith.constant 0 : index
    %22 = vector.load %arg4[%c0_21, %c2_22, %c0_23, %c0_24] : memref<1x4x24x12xbf16, #tpu.memory_space<vmem>>, vector<1x1x24x12xbf16>
    %23 = vector.shape_cast %22 : vector<1x1x24x12xbf16> to vector<24x12xbf16>
    %24 = vector.shape_cast %21 : vector<24x12xbf16> to vector<1x1x24x12xbf16>
    tpu.vector_store %arg4[%c0_21, %c2_22, %c0_23, %c0_24], %24 {strides = array<i32>} : memref<1x4x24x12xbf16, #tpu.memory_space<vmem>>, vector<1x1x24x12xbf16>,
    %c0_25 = arith.constant 0 : index
    %c3 = arith.constant 3 : index
    %c0_26 = arith.constant 0 : index
    %c0_27 = arith.constant 0 : index
    %25 = vector.load %arg2[%c0_25, %c3, %c0_26, %c0_27] : memref<1x4x16x12xf32, #tpu.memory_space<vmem>>, vector<1x1x16x12xf32>
    %26 = vector.shape_cast %25 : vector<1x1x16x12xf32> to vector<16x12xf32>
    %27 = arith.truncf %26 : vector<16x12xf32> to vector<16x12xbf16>
    %cst_28 = arith.constant dense<0.000000e+00> : vector<24x12xf32>
    %28 = tpu.matmul %0, %27, %cst_28 {dimension_numbers = #tpu.dot_dimension_numbers<[1], [0], [0], [1], [0, 0, 1, 1], [], []>} : vector<24x16xbf16>, vector<16x12xbf16>, vector<24x12xf32> -> vector<24x12xf32>
    %29 = arith.truncf %28 : vector<24x12xf32> to vector<24x12xbf16>
    %c0_29 = arith.constant 0 : index
    %c3_30 = arith.constant 3 : index
    %c0_31 = arith.constant 0 : index
    %c0_32 = arith.constant 0 : index
    %30 = vector.load %arg4[%c0_29, %c3_30, %c0_31, %c0_32] : memref<1x4x24x12xbf16, #tpu.memory_space<vmem>>, vector<1x1x24x12xbf16>
    %31 = vector.shape_cast %30 : vector<1x1x24x12xbf16> to vector<24x12xbf16>
    %32 = vector.shape_cast %29 : vector<24x12xbf16> to vector<1x1x24x12xbf16>
    tpu.vector_store %arg4[%c0_29, %c3_30, %c0_31, %c0_32], %32 {strides = array<i32>} : memref<1x4x24x12xbf16, #tpu.memory_space<vmem>>, vector<1x1x24x12xbf16>,
    return
  }
  func.func @transform_0(%arg0: i32, %arg1: i32) -> (i32, i32, i32, i32) {
    %c0_i32 = arith.constant 0 : i32
    %c0_i32_0 = arith.constant 0 : i32
    %c0_i32_1 = arith.constant 0 : i32
    return %arg0, %c0_i32, %c0_i32_0, %arg1 : i32, i32, i32, i32
  }
  func.func @transform_1(%arg0: i32, %arg1: i32) -> (i32, i32) {
    %c0_i32 = arith.constant 0 : i32
    %c0_i32_0 = arith.constant 0 : i32
    %c0_i32_1 = arith.constant 0 : i32
    return %c0_i32, %c0_i32_0 : i32, i32
  }
  func.func @transform_2(%arg0: i32, %arg1: i32) -> (i32, i32, i32, i32) {
    %c0_i32 = arith.constant 0 : i32
    %c0_i32_0 = arith.constant 0 : i32
    %c0_i32_1 = arith.constant 0 : i32
    return %arg0, %c0_i32, %c0_i32_0, %arg1 : i32, i32, i32, i32
  }
}

</mosaic_0001>

<llo_original>
// kernel: tpu_custom_call.1
$region0: #{tpu_custom_call.1}
  #allocation0 [shape = 'u32[]', space=smem, size = 0x4, offset = 0x4, fixed_abs, tag = 'smem constant byte address 0x4 - core index']
  #allocation1 [shape = 'u32[144,128]{1,0:T(1,128)}', space=vmem, size = 0x12000, scoped, tag = 'internal scratch']
  %s0 = inlined_call_operand.vmem [shape: f32[2,4,16,12], index: 0, kind: input, shape index: {}]
  %s1 = inlined_call_operand.vmem [shape: bf16[24,16], index: 1, kind: input, shape index: {}]
  %s2 = inlined_call_operand.vmem [shape: bf16[2,4,24,12], index: 2, kind: output, shape index: {}]
  %s3 = sld [smem:[#allocation0]]
  $region41: #{tpu_custom_call.1} parent=0
    _
  %s5 = ssub.s32 1, %s3
  %s6 = scalar_select 0, %s5, %s3
  loop: start=0, step=1, limit=4
  $region2: #{tpu_custom_call.1} parent=0 // loop_pre_header
    _
  $region3: #{tpu_custom_call.1} parent=0 // loop_header
    %s8 = sphi 0, %s12
    %p9 = scmp.ge.s32.totalorder %s8, 4
    %s15 = sphi 0, %s27
    %s16 = sphi 0, %s23
    %s17 = sphi 0, %s15
    %s18 = sphi 0, %s16
    %s19 = sphi 0, %s17
    %s20 = sphi 0, %s18
    %s32 = sphi 0, %s34
    %s35 = sphi 0, %s32
    %s36 = sphi 0, %s35
    %s52 = sphi 0, %s36
    %s56 = sphi 0, %s56
    %s58 = sphi 0, %s56
    %s59 = sphi 0, %s58
    %s73 = sphi 0, %s59
    %s81 = sphi 0, %s83
    %s84 = sphi 0, %s81
    %s85 = sphi 0, %s84
    %s101 = sphi 0, %s85
  $region4: #{tpu_custom_call.1} parent=0 // loop_header_branch
    %11 = sbr.rel (%p9) target = $region8
  $region5: #{tpu_custom_call.1} parent=0 // loop_body
    %s13 = ssub.s32 %s8, 1
    %s14 = ssub.s32 %s8, 2
    %s21 = sadd.s32 1, %s16
    %p22 = scmp.ge.s32.totalorder %s21, 1
    %s23 = scalar_select %p22, 0, %s21
    %s24 = sadd.s32 1, %s15
    %s25 = scalar_select %p22, %s24, %s15
    %p26 = scmp.ge.s32.totalorder %s25, 2
    %s27 = scalar_select %p26, 0, %s25
    %s28 = ssub.s32 %s15, %s27
    %s29 = ssub.s32 %s16, %s23
    %s30 = sor.u32 %s28, %s29
    %p31 = scmp.eq.s32.totalorder %s30, 0
    %s33 = sadd.s32 %s32, 1
    %s34 = scalar_select %p31, %s32, %s33
    %p37 = pneg %p31
    %p38 = scmp.eq.s32.totalorder %s8, 1
    %p39 = por %p37, %p38
    %p40 = scmp.ne.s32.totalorder %s32, %s35
    %p41 = scmp.eq.s32.totalorder %s8, 0
    %p42 = por %p40, %p41
    %p43 = scmp.ne.s32.totalorder %s32, %s35
    %p44 = scmp.eq.s32.totalorder %s13, 1
    %p45 = por %p43, %p44
    %p46 = scmp.ne.s32.totalorder %s35, %s36
    %p47 = scmp.eq.s32.totalorder %s13, 0
    %p48 = por %p46, %p47
    %p49 = scmp.ne.s32.totalorder %s35, %s36
    %p50 = scmp.eq.s32.totalorder %s14, 1
    %p51 = por %p49, %p50
    %p53 = scmp.ne.s32.totalorder %s36, %s52
    %p54 = scmp.eq.s32.totalorder %s14, 0
    %p55 = por %p53, %p54
    %s57 = sadd.s32 %s56, 1
    %p60 = scmp.eq.s32.totalorder %s8, 1
    %p61 = scmp.ne.s32.totalorder %s56, %s58
    %p62 = scmp.eq.s32.totalorder %s8, 0
    %p63 = por %p61, %p62
    %p64 = scmp.ne.s32.totalorder %s56, %s58
    %p65 = scmp.eq.s32.totalorder %s13, 1
    %p66 = por %p64, %p65
    %p67 = scmp.ne.s32.totalorder %s58, %s59
    %p68 = scmp.eq.s32.totalorder %s13, 0
    %p69 = por %p67, %p68
    %p70 = scmp.ne.s32.totalorder %s58, %s59
    %p71 = scmp.eq.s32.totalorder %s14, 1
    %p72 = por %p70, %p71
    %p74 = scmp.ne.s32.totalorder %s59, %s73
    %p75 = scmp.eq.s32.totalorder %s14, 0
    %p76 = por %p74, %p75
    %s77 = ssub.s32 %s15, %s27
    %s78 = ssub.s32 %s16, %s23
    %s79 = sor.u32 %s77, %s78
    %p80 = scmp.eq.s32.totalorder %s79, 0
    %s82 = sadd.s32 %s81, 1
    %s83 = scalar_select %p80, %s81, %s82
    %p86 = pneg %p80
    %p87 = scmp.eq.s32.totalorder %s8, 1
    %p88 = por %p86, %p87
    %p89 = scmp.ne.s32.totalorder %s81, %s84
    %p90 = scmp.eq.s32.totalorder %s8, 0
    %p91 = por %p89, %p90
    %p92 = scmp.ne.s32.totalorder %s81, %s84
    %p93 = scmp.eq.s32.totalorder %s13, 1
    %p94 = por %p92, %p93
    %p95 = scmp.ne.s32.totalorder %s84, %s85
    %p96 = scmp.eq.s32.totalorder %s13, 0
    %p97 = por %p95, %p96
    %p98 = scmp.ne.s32.totalorder %s84, %s85
    %p99 = scmp.eq.s32.totalorder %s14, 1
    %p100 = por %p98, %p99
    %p102 = scmp.ne.s32.totalorder %s85, %s101
    %p103 = scmp.eq.s32.totalorder %s14, 0
    %p104 = por %p102, %p103
    %p105 = scmp.le.s32.totalorder 1, %s8
    %p106 = scmp.lt.s32.totalorder %s8, 3
    %p107 = pnand %p105, %p106
    %p108 = pneg %p107
    // Predicated region
    $region9: #{tpu_custom_call.1} parent=5 // pred_check
      _
    $region10: #{tpu_custom_call.1} parent=5 // pred_check_branch
      %110 = sbr.rel (%p107) target = $region12
    $region11: #{tpu_custom_call.1} parent=5 // pred_region
      %s111 = ssub.s32 %s8, 1
      // Predicated region
      $region13: #{tpu_custom_call.1} parent=11 // pred_check
        %p112 = pneg %p69
      $region14: #{tpu_custom_call.1} parent=11 // pred_check_branch
        %114 = sbr.rel (%p112) target = $region16
      $region15: #{tpu_custom_call.1} parent=11 // pred_region
        _
      $region16: #{tpu_custom_call.1} parent=11 // pred_fallthru
        _
    $region12: #{tpu_custom_call.1} parent=5 // pred_fallthru
      _
    %p115 = scmp.lt.s32.totalorder %s8, 2
    // Predicated region
    $region17: #{tpu_custom_call.1} parent=5 // pred_check
      %p116 = pneg %p115
    $region18: #{tpu_custom_call.1} parent=5 // pred_check_branch
      %118 = sbr.rel (%p116) target = $region20
    $region19: #{tpu_custom_call.1} parent=5 // pred_region
      // Predicated region
      $region21: #{tpu_custom_call.1} parent=19 // pred_check
        %p119 = pneg %p42
      $region22: #{tpu_custom_call.1} parent=19 // pred_check_branch
        %121 = sbr.rel (%p119) target = $region24
      $region23: #{tpu_custom_call.1} parent=19 // pred_region
        %p122 = scmp.lt.s32.totalorder %s15, 1
        %s123 = scalar_select %p122, %s15, 1
        %p124 = scmp.lt.s32.totalorder %s16, 0
        %s125 = scalar_select %p124, %s16, 0
        %s126 = smul.addr %s123, 8
        %s127 = sadd.s32 %s125, %s126
        %s128 = smul.addr %s127, 8
        %s129 = scalar_lea.vmem %s0, %s128
      $region24: #{tpu_custom_call.1} parent=19 // pred_fallthru
        _
    $region20: #{tpu_custom_call.1} parent=5 // pred_fallthru
      _
    %p130 = scmp.le.s32.totalorder 1, %s8
    %p131 = scmp.lt.s32.totalorder %s8, 3
    %p132 = pnand %p130, %p131
    %p133 = pneg %p132
    // Predicated region
    $region25: #{tpu_custom_call.1} parent=5 // pred_check
      _
    $region26: #{tpu_custom_call.1} parent=5 // pred_check_branch
      %135 = sbr.rel (%p132) target = $region28
    $region27: #{tpu_custom_call.1} parent=5 // pred_region
      %s136 = ssub.s32 %s8, 1
      %p137 = scmp.lt.s32.totalorder %s17, 1
      %s138 = scalar_select %p137, %s17, 1
      %p139 = scmp.lt.s32.totalorder %s18, 0
      %s140 = scalar_select %p139, %s18, 0
      %s141 = smul.addr %s138, 8
      %s142 = sadd.s32 %s140, %s141
      %s143 = smul.addr %s142, 8
      %s144 = scalar_lea.vmem %s0, %s143
      %p145 = pneg %p48
      %p146 = pneg %p45
      %p147 = pneg %p69
      %p148 = pneg %p66
      %p149 = pneg %p97
      %p150 = pneg %p94
      %p151 = scmp.lt.s32.totalorder %s17, 1
      %s152 = scalar_select %p151, %s17, 1
      %p153 = scmp.lt.s32.totalorder %s18, 0
      %s154 = scalar_select %p153, %s18, 0
      %s155 = smul.addr %s152, 12
      %s156 = sadd.s32 %s154, %s155
      %s157 = smul.addr %s156, 4
      %s158 = scalar_lea.vmem %s2, %s157
      %p159 = scmp.lt.s32.totalorder %s17, 1
      %s160 = scalar_select %p159, %s17, 1
      %p161 = scmp.lt.s32.totalorder %s18, 0
      %s162 = scalar_select %p161, %s18, 0
      %s163 = smul.addr %s160, 8
      %s164 = sadd.s32 %s162, %s163
      %s165 = smul.addr %s164, 8
      %s166 = scalar_lea.vmem %s0, %s165
      %p167 = scmp.lt.s32.totalorder %s17, 1
      %s168 = scalar_select %p167, %s17, 1
      %p169 = scmp.lt.s32.totalorder %s18, 0
      %s170 = scalar_select %p169, %s18, 0
      %s171 = smul.addr %s168, 12
      %s172 = sadd.s32 %s170, %s171
      %s173 = smul.addr %s172, 4
      %s174 = scalar_lea.vmem %s2, %s173
      %v176 = vld [vmem:[%s1] sm:$0xf]
      %v177 = vld [vmem:[%s1 + $0x4] sm:$0xf]
      %v178 = vld [vmem:[%s1 + $0x8] sm:$0xf]
      %v179 = vld [vmem:[%s166] sm:$0xff]
      %v180 = vld [vmem:[%s166 + $0x8] sm:$0xff]
      %v181 = vpack.c.bf16 %v180, %v179
      %v185 = vunpack.c.l.b16 %v176
      %v186 = vunpack.c.l.b16 %v177
      %v187 = vunpack.c.l.b16 %v178
      %v188 = vpack.c.b16 %v186, %v185
      %v189 = vpack.c.b16 %v187, %v187
      %vm190 = vcmask 130048
      %v192 = vsel %vm190, %v188, 0
      %v195 = vsel %vm190, %v189, 0
      %197 = vmatprep.subr.bf16.mxu0 0
      %198 = vmatpush1.bf16.msra.mxu0 %v181
      %199 = vmatprep.subr.bf16.mxu0 0
      %200 = vmatpush1.bf16.msra.mxu0 0
      %201 = vmatprep.subr.bf16.mxu0 0
      %202 = vmatpush1.bf16.msra.mxu0 0
      %203 = vmatprep.subr.bf16.mxu0 0
      %204 = vmatpush1.bf16.msra.mxu0 0
      %205 = vmatprep.subr.bf16.mxu0 0
      %206 = vmatpush1.bf16.msra.mxu0 0
      %207 = vmatprep.subr.bf16.mxu0 0
      %208 = vmatpush1.bf16.msra.mxu0 0
      %209 = vmatprep.subr.bf16.mxu0 0
      %210 = vmatpush1.bf16.msra.mxu0 0
      %211 = vmatprep.subr.bf16.mxu0 0
      %212 = vmatpush1.bf16.msra.mxu0 0
      %213 = vmatprep.subr.bf16.mxu0 0
      %214 = vmatpush1.bf16.msra.mxu0 0
      %215 = vmatprep.subr.bf16.mxu0 0
      %216 = vmatpush1.bf16.msra.mxu0 0
      %217 = vmatprep.subr.bf16.mxu0 0
      %218 = vmatpush1.bf16.msra.mxu0 0
      %219 = vmatprep.subr.bf16.mxu0 0
      %220 = vmatpush1.bf16.msra.mxu0 0
      %221 = vmatprep.subr.bf16.mxu0 0
      %222 = vmatpush1.bf16.msra.mxu0 0
      %223 = vmatprep.subr.bf16.mxu0 0
      %224 = vmatpush1.bf16.msra.mxu0 0
      %225 = vmatprep.subr.bf16.mxu0 0
      %226 = vmatpush1.bf16.msra.mxu0 0
      %227 = vmatprep.subr.bf16.mxu0 0
      %228 = vmatpush1.bf16.msra.mxu0 0
      %229 = vmatprep.mubr.bf16.mxu0 0
      %230 = vmatmul.mubr.bf16.gmra.mrb[0].mxu0 %v192
      %v231 = vpop.f32.mrb[0].mxu0
      %v232 = vadd.f32 0.0, %v231
      %v233 = vpop.f32.mrb[0].mxu0
      %v234 = vpop.f32.mrb[0].mxu0
      %v235 = vadd.f32 0.0, %v234
      %v236 = vpop.f32.mrb[0].mxu0
      %237 = vmatprep.mubr.bf16.mxu0 0
      %238 = vmatmul.mubr.bf16.gmra.mrb[0].mxu0 %v195
      %v239 = vpop.f32.mrb[0].mxu0
      %v240 = vadd.f32 0.0, %v239
      %v241 = vpop.f32.mrb[0].mxu0
      %v242 = vpop.f32.mrb[0].mxu0
      %v243 = vpop.f32.mrb[0].mxu0
      %244 = vdwg.mxu0
      %v245 = vpack.c.bf16 %v235, %v232
      %v246 = vpack.c.bf16 %v240, %v240
      %v249 = vunpack.c.l.b16 %v245
      %v250 = vunpack.c.h.b16 %v245
      %v251 = vunpack.c.l.b16 %v246
      %v252 = vpack.c.b16 %v249, %v249
      %v253 = vpack.c.b16 %v250, %v250
      %v254 = vpack.c.b16 %v251, %v251
      %vm258 = vcmask 93184
      %259 = vst.msk [vmem:[%s174] sm:$0xf] %vm258, %v252
      %260 = vst.msk [vmem:[%s174 + $0x4] sm:$0xf] %vm258, %v253
      %261 = vst.msk [vmem:[%s174 + $0x8] sm:$0xf] %vm258, %v254
      %s262 = scalar_lea.vmem %s166, 16
      %v263 = vld [vmem:[%s262] sm:$0xff]
      %v264 = vld [vmem:[%s262 + $0x8] sm:$0xff]
      %v265 = vpack.c.bf16 %v264, %v263
      %266 = vmatprep.subr.bf16.mxu0 0
      %267 = vmatpush1.bf16.msra.mxu0 %v265
      %268 = vmatprep.subr.bf16.mxu0 0
      %269 = vmatpush1.bf16.msra.mxu0 0
      %270 = vmatprep.subr.bf16.mxu0 0
      %271 = vmatpush1.bf16.msra.mxu0 0
      %272 = vmatprep.subr.bf16.mxu0 0
      %273 = vmatpush1.bf16.msra.mxu0 0
      %274 = vmatprep.subr.bf16.mxu0 0
      %275 = vmatpush1.bf16.msra.mxu0 0
      %276 = vmatprep.subr.bf16.mxu0 0
      %277 = vmatpush1.bf16.msra.mxu0 0
      %278 = vmatprep.subr.bf16.mxu0 0
      %279 = vmatpush1.bf16.msra.mxu0 0
      %280 = vmatprep.subr.bf16.mxu0 0
      %281 = vmatpush1.bf16.msra.mxu0 0
      %282 = vmatprep.subr.bf16.mxu0 0
      %283 = vmatpush1.bf16.msra.mxu0 0
      %284 = vmatprep.subr.bf16.mxu0 0
      %285 = vmatpush1.bf16.msra.mxu0 0
      %286 = vmatprep.subr.bf16.mxu0 0
      %287 = vmatpush1.bf16.msra.mxu0 0
      %288 = vmatprep.subr.bf16.mxu0 0
      %289 = vmatpush1.bf16.msra.mxu0 0
      %290 = vmatprep.subr.bf16.mxu0 0
      %291 = vmatpush1.bf16.msra.mxu0 0
      %292 = vmatprep.subr.bf16.mxu0 0
      %293 = vmatpush1.bf16.msra.mxu0 0
      %294 = vmatprep.subr.bf16.mxu0 0
      %295 = vmatpush1.bf16.msra.mxu0 0
      %296 = vmatprep.subr.bf16.mxu0 0
      %297 = vmatpush1.bf16.msra.mxu0 0
      %298 = vmatprep.mubr.bf16.mxu0 0
      %299 = vmatmul.mubr.bf16.gmra.mrb[0].mxu0 %v192
      %v300 = vpop.f32.mrb[0].mxu0
      %v301 = vadd.f32 0.0, %v300
      %v302 = vpop.f32.mrb[0].mxu0
      %v303 = vpop.f32.mrb[0].mxu0
      %v304 = vadd.f32 0.0, %v303
      %v305 = vpop.f32.mrb[0].mxu0
      %306 = vmatprep.mubr.bf16.mxu0 0
      %307 = vmatmul.mubr.bf16.gmra.mrb[0].mxu0 %v195
      %v308 = vpop.f32.mrb[0].mxu0
      %v309 = vadd.f32 0.0, %v308
      %v310 = vpop.f32.mrb[0].mxu0
      %v311 = vpop.f32.mrb[0].mxu0
      %v312 = vpop.f32.mrb[0].mxu0
      %313 = vdwg.mxu0
      %v314 = vpack.c.bf16 %v304, %v301
      %v315 = vpack.c.bf16 %v309, %v309
      %v318 = vunpack.c.l.b16 %v314
      %v319 = vunpack.c.h.b16 %v314
      %v320 = vunpack.c.l.b16 %v315
      %v321 = vpack.c.b16 %v318, %v318
      %v322 = vpack.c.b16 %v319, %v319
      %v323 = vpack.c.b16 %v320, %v320
      %s327 = scalar_lea.vmem %s174, 12
      %328 = vst.msk [vmem:[%s327] sm:$0xf] %vm258, %v321
      %329 = vst.msk [vmem:[%s327 + $0x4] sm:$0xf] %vm258, %v322
      %330 = vst.msk [vmem:[%s327 + $0x8] sm:$0xf] %vm258, %v323
      %s331 = scalar_lea.vmem %s166, 32
      %v332 = vld [vmem:[%s331] sm:$0xff]
      %v333 = vld [vmem:[%s331 + $0x8] sm:$0xff]
      %v334 = vpack.c.bf16 %v333, %v332
      %335 = vmatprep.subr.bf16.mxu0 0
      %336 = vmatpush1.bf16.msra.mxu0 %v334
      %337 = vmatprep.subr.bf16.mxu0 0
      %338 = vmatpush1.bf16.msra.mxu0 0
      %339 = vmatprep.subr.bf16.mxu0 0
      %340 = vmatpush1.bf16.msra.mxu0 0
      %341 = vmatprep.subr.bf16.mxu0 0
      %342 = vmatpush1.bf16.msra.mxu0 0
      %343 = vmatprep.subr.bf16.mxu0 0
      %344 = vmatpush1.bf16.msra.mxu0 0
      %345 = vmatprep.subr.bf16.mxu0 0
      %346 = vmatpush1.bf16.msra.mxu0 0
      %347 = vmatprep.subr.bf16.mxu0 0
      %348 = vmatpush1.bf16.msra.mxu0 0
      %349 = vmatprep.subr.bf16.mxu0 0
      %350 = vmatpush1.bf16.msra.mxu0 0
      %351 = vmatprep.subr.bf16.mxu0 0
      %352 = vmatpush1.bf16.msra.mxu0 0
      %353 = vmatprep.subr.bf16.mxu0 0
      %354 = vmatpush1.bf16.msra.mxu0 0
      %355 = vmatprep.subr.bf16.mxu0 0
      %356 = vmatpush1.bf16.msra.mxu0 0
      %357 = vmatprep.subr.bf16.mxu0 0
      %358 = vmatpush1.bf16.msra.mxu0 0
      %359 = vmatprep.subr.bf16.mxu0 0
      %360 = vmatpush1.bf16.msra.mxu0 0
      %361 = vmatprep.subr.bf16.mxu0 0
      %362 = vmatpush1.bf16.msra.mxu0 0
      %363 = vmatprep.subr.bf16.mxu0 0
      %364 = vmatpush1.bf16.msra.mxu0 0
      %365 = vmatprep.subr.bf16.mxu0 0
      %366 = vmatpush1.bf16.msra.mxu0 0
      %367 = vmatprep.mubr.bf16.mxu0 0
      %368 = vmatmul.mubr.bf16.gmra.mrb[0].mxu0 %v192
      %v369 = vpop.f32.mrb[0].mxu0
      %v370 = vadd.f32 0.0, %v369
      %v371 = vpop.f32.mrb[0].mxu0
      %v372 = vpop.f32.mrb[0].mxu0
      %v373 = vadd.f32 0.0, %v372
      %v374 = vpop.f32.mrb[0].mxu0
      %375 = vmatprep.mubr.bf16.mxu0 0
      %376 = vmatmul.mubr.bf16.gmra.mrb[0].mxu0 %v195
      %v377 = vpop.f32.mrb[0].mxu0
      %v378 = vadd.f32 0.0, %v377
      %v379 = vpop.f32.mrb[0].mxu0
      %v380 = vpop.f32.mrb[0].mxu0
      %v381 = vpop.f32.mrb[0].mxu0
      %382 = vdwg.mxu0
      %v383 = vpack.c.bf16 %v373, %v370
      %v384 = vpack.c.bf16 %v378, %v378
      %v387 = vunpack.c.l.b16 %v383
      %v388 = vunpack.c.h.b16 %v383
      %v389 = vunpack.c.l.b16 %v384
      %v390 = vpack.c.b16 %v387, %v387
      %v391 = vpack.c.b16 %v388, %v388
      %v392 = vpack.c.b16 %v389, %v389
      %s396 = scalar_lea.vmem %s174, 24
      %397 = vst.msk [vmem:[%s396] sm:$0xf] %vm258, %v390
      %398 = vst.msk [vmem:[%s396 + $0x4] sm:$0xf] %vm258, %v391
      %399 = vst.msk [vmem:[%s396 + $0x8] sm:$0xf] %vm258, %v392
      %s400 = scalar_lea.vmem %s166, 48
      %v401 = vld [vmem:[%s400] sm:$0xff]
      %v402 = vld [vmem:[%s400 + $0x8] sm:$0xff]
      %v403 = vpack.c.bf16 %v402, %v401
      %404 = vmatprep.subr.bf16.mxu0 0
      %405 = vmatpush1.bf16.msra.mxu0 %v403
      %406 = vmatprep.subr.bf16.mxu0 0
      %407 = vmatpush1.bf16.msra.mxu0 0
      %408 = vmatprep.subr.bf16.mxu0 0
      %409 = vmatpush1.bf16.msra.mxu0 0
      %410 = vmatprep.subr.bf16.mxu0 0
      %411 = vmatpush1.bf16.msra.mxu0 0
      %412 = vmatprep.subr.bf16.mxu0 0
      %413 = vmatpush1.bf16.msra.mxu0 0
      %414 = vmatprep.subr.bf16.mxu0 0
      %415 = vmatpush1.bf16.msra.mxu0 0
      %416 = vmatprep.subr.bf16.mxu0 0
      %417 = vmatpush1.bf16.msra.mxu0 0
      %418 = vmatprep.subr.bf16.mxu0 0
      %419 = vmatpush1.bf16.msra.mxu0 0
      %420 = vmatprep.subr.bf16.mxu0 0
      %421 = vmatpush1.bf16.msra.mxu0 0
      %422 = vmatprep.subr.bf16.mxu0 0
      %423 = vmatpush1.bf16.msra.mxu0 0
      %424 = vmatprep.subr.bf16.mxu0 0
      %425 = vmatpush1.bf16.msra.mxu0 0
      %426 = vmatprep.subr.bf16.mxu0 0
      %427 = vmatpush1.bf16.msra.mxu0 0
      %428 = vmatprep.subr.bf16.mxu0 0
      %429 = vmatpush1.bf16.msra.mxu0 0
      %430 = vmatprep.subr.bf16.mxu0 0
      %431 = vmatpush1.bf16.msra.mxu0 0
      %432 = vmatprep.subr.bf16.mxu0 0
      %433 = vmatpush1.bf16.msra.mxu0 0
      %434 = vmatprep.subr.bf16.mxu0 0
      %435 = vmatpush1.bf16.msra.mxu0 0
      %436 = vmatprep.mubr.bf16.mxu0 0
      %437 = vmatmul.mubr.bf16.gmra.mrb[0].mxu0 %v192
      %v438 = vpop.f32.mrb[0].mxu0
      %v439 = vadd.f32 0.0, %v438
      %v440 = vpop.f32.mrb[0].mxu0
      %v441 = vpop.f32.mrb[0].mxu0
      %v442 = vadd.f32 0.0, %v441
      %v443 = vpop.f32.mrb[0].mxu0
      %444 = vmatprep.mubr.bf16.mxu0 0
      %445 = vmatmul.mubr.bf16.gmra.mrb[0].mxu0 %v195
      %v446 = vpop.f32.mrb[0].mxu0
      %v447 = vadd.f32 0.0, %v446
      %v448 = vpop.f32.mrb[0].mxu0
      %v449 = vpop.f32.mrb[0].mxu0
      %v450 = vpop.f32.mrb[0].mxu0
      %451 = vdwg.mxu0
      %v452 = vpack.c.bf16 %v442, %v439
      %v453 = vpack.c.bf16 %v447, %v447
      %v456 = vunpack.c.l.b16 %v452
      %v457 = vunpack.c.h.b16 %v452
      %v458 = vunpack.c.l.b16 %v453
      %v459 = vpack.c.b16 %v456, %v456
      %v460 = vpack.c.b16 %v457, %v457
      %v461 = vpack.c.b16 %v458, %v458
      %s465 = scalar_lea.vmem %s174, 36
      %466 = vst.msk [vmem:[%s465] sm:$0xf] %vm258, %v459
      %467 = vst.msk [vmem:[%s465 + $0x4] sm:$0xf] %vm258, %v460
      %468 = vst.msk [vmem:[%s465 + $0x8] sm:$0xf] %vm258, %v461
      %p469 = scmp.lt.s32.totalorder %s17, 1
      %s470 = scalar_select %p469, %s17, 1
      %p471 = scmp.lt.s32.totalorder %s18, 0
      %s472 = scalar_select %p471, %s18, 0
      %s473 = smul.addr %s470, 12
      %s474 = sadd.s32 %s472, %s473
      %s475 = smul.addr %s474, 4
      %s476 = scalar_lea.vmem %s2, %s475
      // Predicated region
      $region29: #{tpu_custom_call.1} parent=27 // pred_check
        %p477 = pneg %p94
      $region30: #{tpu_custom_call.1} parent=27 // pred_check_branch
        %479 = sbr.rel (%p477) target = $region32
      $region31: #{tpu_custom_call.1} parent=27 // pred_region
        _
      $region32: #{tpu_custom_call.1} parent=27 // pred_fallthru
        _
    $region28: #{tpu_custom_call.1} parent=5 // pred_fallthru
      _
    %p480 = scmp.le.s32.totalorder 2, %s8
    // Predicated region
    $region33: #{tpu_custom_call.1} parent=5 // pred_check
      %p481 = pneg %p480
    $region34: #{tpu_custom_call.1} parent=5 // pred_check_branch
      %483 = sbr.rel (%p481) target = $region36
    $region35: #{tpu_custom_call.1} parent=5 // pred_region
      %s484 = ssub.s32 %s8, 2
      // Predicated region
      $region37: #{tpu_custom_call.1} parent=35 // pred_check
        %p485 = pneg %p100
      $region38: #{tpu_custom_call.1} parent=35 // pred_check_branch
        %487 = sbr.rel (%p485) target = $region40
      $region39: #{tpu_custom_call.1} parent=35 // pred_region
        %p488 = scmp.lt.s32.totalorder %s19, 1
        %s489 = scalar_select %p488, %s19, 1
        %p490 = scmp.lt.s32.totalorder %s20, 0
        %s491 = scalar_select %p490, %s20, 0
        %s492 = smul.addr %s489, 12
        %s493 = sadd.s32 %s491, %s492
        %s494 = smul.addr %s493, 4
        %s495 = scalar_lea.vmem %s2, %s494
      $region40: #{tpu_custom_call.1} parent=35 // pred_fallthru
        _
    $region36: #{tpu_custom_call.1} parent=5 // pred_fallthru
      _
  $region6: #{tpu_custom_call.1} parent=0 // loop_footer
    %s12 = sadd.s32 1, %s8
  $region7: #{tpu_custom_call.1} parent=0 // loop_footer_branch
    %7 = sbr.rel target = $region3
  $region8: #{tpu_custom_call.1} parent=0 // loop_exit
    _

</llo_original>
